<compile_context>
chip_gen: v7x
topology: tpu7x:2x2x1
jax: 0.10.0
libtpu: 0.0.40
codegen_flags: <defaults>
</compile_context>

<pallas_src>
import math
import functools

import jax
import jax.numpy as jnp
from jax.experimental import pallas as pl
from jax.experimental.pallas import tpu as pltpu


def _round_up(x, m):
    return ((x + m - 1) // m) * m


# ----------------------------------------------------------------------------
# Kernel 1: projection score  y = tanh(x . (p / ||p||))
# ----------------------------------------------------------------------------
def _score_kernel(use_mxu, x_ref, w_ref, score_ref):
    x = x_ref[...]
    if use_mxu:
        # Wide C: C-reduction on the MXU. w_ref is (C, 1), already 1/||p||-scaled and
        # pre-cast to the MXU-friendly dtype (bf16 stays bf16, everything else f32).
        if x.dtype != w_ref.dtype:
            x = x.astype(w_ref.dtype)          # per-tile cast, no extra HBM pass
        proj = jnp.dot(x, w_ref[...], preferred_element_type=jnp.float32)     # (tn, 1)
    else:
        # Narrow C: VPU multiply + lane reduce in f32 (v5e VPU has no bf16 support).
        xf = x.astype(jnp.float32)             # per-tile upcast, no extra HBM pass
        proj = jnp.sum(xf * w_ref[...], axis=-1, keepdims=True)               # (tn, 1)
    score_ref[...] = jnp.tanh(proj)


def compute_scores(attn, weight):
    N, C = attn.shape
    in_dtype = attn.dtype
    use_mxu = C >= 128

    # Hoist the norm: prescale the weight once (a [1,C] op) instead of
    # re-reducing + sqrt + dividing inside every grid step.
    norm = jnp.linalg.norm(weight.astype(jnp.float32))
    w = weight.astype(jnp.float32)
    if w.shape[1] != C:
        # attn was 1-D: (attn * w).sum(-1) broadcast-reduces to attn[:, 0] * w.sum()
        w = jnp.sum(w, axis=1, keepdims=True)
    w_scaled = w / norm

    if use_mxu:
        w_dtype = jnp.bfloat16 if in_dtype == jnp.bfloat16 else jnp.float32
        w_in = w_scaled.T.astype(w_dtype)                              # (C, 1)
        w_spec = pl.BlockSpec((C, 1), lambda i: (0, 0))
    else:
        w_in = w_scaled                                                # (1, C) f32
        w_spec = pl.BlockSpec((1, C), lambda i: (0, 0))

    # Byte-budget row tile: ~6 MiB of f32-equivalent data per input buffer. With
    # double buffering + the (at most tile-sized) in-kernel f32 upcast this stays
    # well under 28 MiB of VMEM on every generation.
    budget_bytes = 6 * 1024 * 1024
    budget_rows = max(8, budget_bytes // max(1, C * 4))
    tn = max(8, min(_round_up(N, 8), _round_up(budget_rows, 8)))

    return pl.pallas_call(
        functools.partial(_score_kernel, use_mxu),
        out_shape=jax.ShapeDtypeStruct((N, 1), jnp.float32),
        grid_spec=pltpu.PrefetchScalarGridSpec(
            num_scalar_prefetch=0,
            grid=(pl.cdiv(N, tn),),
            in_specs=[
                pl.BlockSpec((tn, C), lambda i: (i, 0)),
                w_spec,
            ],
            out_specs=pl.BlockSpec((tn, 1), lambda i: (i, 0)),
        ),
        # stateless per tile -> safe to shard across TensorCores (2x on v7x);
        # explicit scoped-VMEM limit: fits v7x's 64 MiB physical and raises
        # v5e's 16 MiB default enough for the double-buffered 6 MiB tiles.
        compiler_params=pltpu.CompilerParams(
            dimension_semantics=("parallel",),
            vmem_limit_bytes=32 * 1024 * 1024,
        ),
    )(attn, w_in)


# ----------------------------------------------------------------------------
# Kernel 2: batched row gather + scale (wide-C path)
#   X'[g*B + j] = X[perm[g*B + j]] * scale[g*B + j]        (scale = score*multiplier)
# x lives in HBM; B row DMAs per block, double-buffered across grid steps, a single
# aggregated byte-count wait per slot.
# ----------------------------------------------------------------------------
def _gather_scale_kernel(B, perm_ref, s_ref, x_hbm, xo_ref, buf, sem):
    g = pl.program_id(0)
    nb = pl.num_programs(0)
    slot = g & 1

    def start_block(blk, slot_):
        base = blk * B
        for j in range(B):
            idx = perm_ref[base + j]
            pltpu.make_async_copy(
                x_hbm.at[pl.ds(idx, 1), :],
                buf.at[slot_, pl.ds(j, 1), :],
                sem.at[slot_],
            ).start()

    def wait_block(slot_):
        # One aggregated wait: the B row copies issued into this slot sum to exactly
        # one (B, C) slab of bytes on sem[slot_] (DMA semaphores count bytes, and all
        # B copies are always issued because perm is padded). The src here is a dummy
        # same-shape/dtype ref (other slot) used only for size accounting.
        pltpu.make_async_copy(
            buf.at[1 - slot_],
            buf.at[slot_],
            sem.at[slot_],
        ).wait()

    @pl.when(g == 0)
    def _():
        start_block(0, 0)                      # prime the pipeline

    @pl.when(g + 1 < nb)
    def _():
        start_block(g + 1, 1 - slot)           # prefetch next block into the other slot

    wait_block(slot)

    scale = s_ref[...]                             # (B, 1): score[perm] * multiplier
    rows = buf[slot].astype(jnp.float32) * scale   # one vectorized (B, C) multiply
    xo_ref[...] = rows.astype(xo_ref.dtype)        # one dense (B, C) store


def gather_and_scale(x, score1d, perm, multiplier):
    N, C = x.shape
    K = int(perm.shape[0])

    score_perm = score1d[perm]                                     # tiny (K,) JAX gather
    if K == 0:                                                     # empty selection guard
        return jnp.zeros((0, C), x.dtype), score_perm

    # Fold the multiplier into the per-row scale once, outside the kernel.
    scale = score_perm * jnp.float32(multiplier) if multiplier != 1.0 else score_perm

    if C < 128:
        # Each gathered row is < 512 B -> DMA descriptor/latency cost dominates the
        # per-row-DMA kernel completely; XLA's native coalesced gather wins here.
        xo = (jnp.take(x, perm, axis=0).astype(jnp.float32)
              * scale[:, None]).astype(x.dtype)
        return xo, score_perm

    # ---- Pallas per-row-DMA path (C >= 128) ----
    itemsize = jnp.dtype(x.dtype).itemsize
    budget_rows = max(8, (2 * 1024 * 1024) // max(1, C * itemsize))    # <=2 MiB per slot
    B = max(8, min(128, _round_up(K, 8), _round_up(budget_rows, 8)))
    nblocks = (K + B - 1) // B
    K_pad = nblocks * B

    perm_pad = jnp.pad(perm.astype(jnp.int32), (0, K_pad - K))        # pad -> row 0 (safe)
    sp_pad = jnp.pad(scale.astype(jnp.float32), (0, K_pad - K)).reshape(K_pad, 1)

    kernel = functools.partial(_gather_scale_kernel, B)
    xo = pl.pallas_call(
        kernel,
        out_shape=jax.ShapeDtypeStruct((K_pad, C), x.dtype),
        grid_spec=pltpu.PrefetchScalarGridSpec(
            num_scalar_prefetch=1,             # perm lands in SMEM, drives the row DMAs
            grid=(nblocks,),
            in_specs=[
                pl.BlockSpec((B, 1), lambda g, perm_ref: (g, 0)),  # permuted scale column
                pl.BlockSpec(memory_space=pl.ANY),                 # x stays in HBM
            ],
            out_specs=pl.BlockSpec((B, C), lambda g, perm_ref: (g, 0)),
            scratch_shapes=[
                pltpu.VMEM((2, B, C), x.dtype),                    # double-buffered slab
                pltpu.SemaphoreType.DMA((2,)),
            ],
        ),
        # "arbitrary": the manual double-buffer (prefetch of block g+1) carries state
        # across grid steps, so the grid must run sequentially on one core.
        # TODO(synk): v7x could split this grid across the 2 TensorCores (core-parallel
        # leading axis, per-core scratch/sems) for ~2x DMA issue throughput.
        compiler_params=pltpu.CompilerParams(
            dimension_semantics=("arbitrary",),
            vmem_limit_bytes=32 * 1024 * 1024,
        ),
    )(perm_pad, sp_pad, x)
    return xo[:K], score_perm


# ----------------------------------------------------------------------------
# top-k index bookkeeping (mirrors torch `topk(x, ratio, batch)` with min_score=None)
# Pure index math / sort -> plain JAX glue, run eagerly on concrete arrays.
# TODO(synk): not jittable (data-dependent output size K forces host round-trips).
# ----------------------------------------------------------------------------
def topk_perm(score, ratio, batch, num_graphs):
    N = score.shape[0]
    num_nodes = jnp.zeros((num_graphs,), jnp.int32).at[batch].add(jnp.ones((N,), jnp.int32))
    max_num_nodes = int(jnp.max(num_nodes))
    cum = jnp.concatenate([jnp.zeros((1,), jnp.int32), jnp.cumsum(num_nodes)[:-1]])
    index = jnp.arange(N, dtype=jnp.int32) - cum[batch] + batch * max_num_nodes
    dense = jnp.full((num_graphs * max_num_nodes,), jnp.finfo(score.dtype).min, score.dtype)
    dense = dense.at[index].set(score).reshape(num_graphs, max_num_nodes)
    perm = jnp.argsort(-dense, axis=-1)                       # descending sort per graph
    perm = (perm + cum[:, None]).reshape(-1)
    k = jnp.ceil(ratio * num_nodes.astype(jnp.float32)).astype(jnp.int32)
    k_list = [int(v) for v in k]
    mask = jnp.concatenate(
        [jnp.arange(k_list[i], dtype=jnp.int32) + i * max_num_nodes for i in range(num_graphs)]
    )
    return perm[mask].astype(jnp.int32)


# ----------------------------------------------------------------------------
# Module wrapper
# ----------------------------------------------------------------------------
class TopKPoolingPallas:
    def __init__(self, in_channels, ratio=0.5, min_score=None, multiplier=1.0, key=None):
        # TODO(synk): min_score branch (per-graph softmax + threshold select) not implemented;
        # the default (min_score=None) path is reproduced exactly.
        assert min_score is None
        self.in_channels = in_channels
        self.ratio = ratio
        self.multiplier = multiplier
        bound = 1.0 / math.sqrt(in_channels)
        key = jax.random.PRNGKey(0) if key is None else key
        # uniform(-1/sqrt(C), 1/sqrt(C)), matching torch `uniform(size, tensor)`
        self.weight = jax.random.uniform(
            key, (1, in_channels), jnp.float32, minval=-bound, maxval=bound
        )

    def __call__(self, x, batch, attn=None, num_graphs=None):
        attn = x if attn is None else attn
        if attn.ndim == 1:
            attn = attn[:, None]
        score2d = compute_scores(attn, self.weight)               # Pallas kernel 1
        score = score2d[:, 0]
        if num_graphs is None:
            num_graphs = int(jnp.max(batch)) + 1
        perm = topk_perm(score, self.ratio, batch, num_graphs)    # eager index glue
        x_out, score_perm = gather_and_scale(x, score, perm, self.multiplier)  # kernel 2
        batch_out = batch[perm]
        return x_out, batch_out, perm, score_perm


if __name__ == "__main__":
    key = jax.random.PRNGKey(0)
    kx1, kw1, kx2, kw2 = jax.random.split(key, 4)

    # two graphs: 10 nodes + 6 nodes  -> N = 16, k = ceil(0.5*10)=5, ceil(0.5*6)=3, K = 8
    batch = jnp.array([0] * 10 + [1] * 6, dtype=jnp.int32)
    N = int(batch.shape[0])

    def run_case(C, kx, kw, multiplier):
        x = jax.random.normal(kx, (N, C), dtype=jnp.float32)
        pool = TopKPoolingPallas(C, ratio=0.5, multiplier=multiplier, key=kw)
        x_out, batch_out, perm, score_perm = pool(x, batch)
        jax.block_until_ready((x_out, batch_out, perm, score_perm))

        # pure-JAX reference check of the hot paths
        w = pool.weight
        score_ref = jnp.tanh((x * w).sum(-1) / jnp.linalg.norm(w))
        x_out_ref = x[perm] * score_ref[perm][:, None]
        if multiplier != 1.0:
            x_out_ref = x_out_ref * multiplier
        assert jnp.allclose(score_perm, score_ref[perm], atol=1e-5), "score mismatch"
        assert jnp.allclose(x_out, x_out_ref, atol=1e-5), "gathered features mismatch"
        assert jnp.array_equal(batch_out, batch[perm]), "batch mismatch"

    # narrow C: VPU mul+reduce score path + XLA gather fallback
    run_case(16, kx1, kw1, multiplier=1.0)
    # wide C: MXU score path + Pallas per-row-DMA gather kernel (with multiplier folding)
    run_case(256, kx2, kw2, multiplier=2.0)

    print("KERNEL_OK")
</pallas_src>

<mosaic_0001>
module attributes {stable_mosaic.version = 11 : i64} {
  func.func @_score_kernel(%arg0: i32, %arg1: memref<16x16xf32, #tpu.memory_space<vmem>>, %arg2: memref<1x16xf32, #tpu.memory_space<vmem>>, %arg3: memref<16x1xf32, #tpu.memory_space<vmem>>) attributes {dimension_semantics = [#tpu.dimension_semantics<parallel>], iteration_bounds = array<i64: 1>, scalar_prefetch = 0 : i64, scratch_operands = 0 : i64, tpu.core_type = #tpu.core_type<tc>, window_params = [{transform_indices = @transform_0, window_bounds = array<i64: 16, 16>}, {pipeline_mode = #tpu.pipeline_mode<synchronous>, transform_indices = @transform_1, window_bounds = array<i64: 1, 16>}, {transform_indices = @transform_2, window_bounds = array<i64: 16, 1>}]} {
    %c0 = arith.constant 0 : index
    %c0_0 = arith.constant 0 : index
    %0 = vector.load %arg1[%c0, %c0_0] : memref<16x16xf32, #tpu.memory_space<vmem>>, vector<16x16xf32>
    %c0_1 = arith.constant 0 : index
    %c0_2 = arith.constant 0 : index
    %1 = vector.load %arg2[%c0_1, %c0_2] : memref<1x16xf32, #tpu.memory_space<vmem>>, vector<1x16xf32>
    %2 = vector.broadcast %1 : vector<1x16xf32> to vector<16x16xf32>
    %3 = arith.mulf %0, %2 : vector<16x16xf32>
    %cst = arith.constant dense<0.000000e+00> : vector<16xf32>
    %4 = vector.multi_reduction <add>, %3, %cst [1] : vector<16x16xf32> to vector<16xf32>
    %5 = vector.shape_cast %4 : vector<16xf32> to vector<16x1xf32>
    %6 = math.tanh %5 : vector<16x1xf32>
    %c0_3 = arith.constant 0 : index
    %c0_4 = arith.constant 0 : index
    %7 = vector.load %arg3[%c0_3, %c0_4] : memref<16x1xf32, #tpu.memory_space<vmem>>, vector<16x1xf32>
    tpu.vector_store %arg3[%c0_3, %c0_4], %6 {strides = array<i32>} : memref<16x1xf32, #tpu.memory_space<vmem>>, vector<16x1xf32>,
    return
  }
  func.func @transform_0(%arg0: i32) -> (i32, i32) {
    %c0_i32 = arith.constant 0 : i32
    %c0_i32_0 = arith.constant 0 : i32
    return %arg0, %c0_i32 : i32, i32
  }
  func.func @transform_1(%arg0: i32) -> (i32, i32) {
    %c0_i32 = arith.constant 0 : i32
    %c0_i32_0 = arith.constant 0 : i32
    %c0_i32_1 = arith.constant 0 : i32
    return %c0_i32, %c0_i32_0 : i32, i32
  }
  func.func @transform_2(%arg0: i32) -> (i32, i32) {
    %c0_i32 = arith.constant 0 : i32
    %c0_i32_0 = arith.constant 0 : i32
    return %arg0, %c0_i32 : i32, i32
  }
}

</mosaic_0001>

<llo_original>
// kernel: tpu_custom_call.1
$region0: #{tpu_custom_call.1}
  #allocation0 [shape = 'u32[]', space=smem, size = 0x4, offset = 0x4, fixed_abs, tag = 'smem constant byte address 0x4 - core index']
  #allocation1 [shape = 'u32[144,128]{1,0:T(1,128)}', space=vmem, size = 0x12000, scoped, tag = 'internal scratch']
  %s0 = inlined_call_operand.hbm [shape: f32[16,16], index: 0, kind: input, shape index: {}]
  %s1 = inlined_call_operand.vmem [shape: f32[1,16], index: 1, kind: input, shape index: {}]
  %s2 = inlined_call_operand.vmem [shape: f32[16,1], index: 2, kind: output, shape index: {}]
  %s3 = sld [smem:[#allocation0]]
  $region22: #{tpu_custom_call.1} parent=0
    _
  %s5 = ssub.s32 1, %s3
  %s6 = scalar_select 0, %s5, %s3
  $region1: #{tpu_custom_call.1} parent=0
    #allocation2 [shape = 'u8[8192]{0}', space=vmem, size = 0x2000, scoped, tag = 'input window, operand 0, single buffered']
    #allocation3 [shape = 's32[1]{0}', space=sflag, size = 0x4, scoped, tag = 'scoped memory for tpu_custom_call.1']
    %7 = vsyncpa [#allocation3], 0
    // Predicated region
    $region2: #{tpu_custom_call.1} parent=1 // pred_check
      _
    $region3: #{tpu_custom_call.1} parent=1 // pred_check_branch
      %9 = sbr.rel (0) target = $region5
    $region4: #{tpu_custom_call.1} parent=1 // pred_region
      %s11 = ssub.s32 256, 256
      %12 = vsyncadd [#allocation3], %s11
      %s13 = sshll.u32 [#allocation2], 4
      %s14 = int_to_ptr.vmem [resolvable:$true] %s13
      %19 = dma.hbm_to_vmem [thread:$0]  %s0, 256, %s14, [#allocation3], 128, 128, 8
    $region5: #{tpu_custom_call.1} parent=1 // pred_fallthru
      _
    // Predicated region
    $region6: #{tpu_custom_call.1} parent=1 // pred_check
      _
    $region7: #{tpu_custom_call.1} parent=1 // pred_check_branch
      %21 = sbr.rel (0) target = $region9
    $region8: #{tpu_custom_call.1} parent=1 // pred_region
      _
    $region9: #{tpu_custom_call.1} parent=1 // pred_fallthru
      _
    // Predicated region
    $region10: #{tpu_custom_call.1} parent=1 // pred_check
      _
    $region11: #{tpu_custom_call.1} parent=1 // pred_check_branch
      %23 = sbr.rel (0) target = $region13
    $region12: #{tpu_custom_call.1} parent=1 // pred_region
      %24 = dma.done [#allocation3], 256
    $region13: #{tpu_custom_call.1} parent=1 // pred_fallthru
      _
    %v25 = vld [vmem:[#allocation2] sm:$0xff]
    %v26 = vld [vmem:[#allocation2 + $0x8] sm:$0xff]
    %v27 = vld [vmem:[%s1] sm:$0x1]
    %v29 = vlaneseq
    %v30 = vshrl.u32 %v29, 7
    %v31 = vsub.s32 0, %v30
    %v32 = vrot.slane %v27, %v31
    %v34 = vmul.f32 %v25, %v32
    %v35 = vmul.f32 %v26, %v32
    %vm36 = vcmask 130048
    %v37 = vsel %vm36, %v34, 0.0
    %38 = vadd.xlane.f32.xlu0 %v37
    %v39 = vpop.xlane.xlu0 %38
    %v40 = vsel %vm36, %v35, 0.0
    %41 = vadd.xlane.f32.xlu0 %v40
    %v42 = vpop.xlane.xlu0 %41
    %v43 = vtanh.pop %v39
    %v44 = vtanh.pop %v42
    %vm45 = vcmask 7168
    %46 = vst.msk [vmem:[%s2] sm:$0xff] %vm45, %v43
    %47 = vst.msk [vmem:[%s2 + $0x8] sm:$0xff] %vm45, %v44
    // Predicated region
    $region14: #{tpu_custom_call.1} parent=1 // pred_check
      _
    $region15: #{tpu_custom_call.1} parent=1 // pred_check_branch
      %49 = sbr.rel (0) target = $region17
    $region16: #{tpu_custom_call.1} parent=1 // pred_region
      _
    $region17: #{tpu_custom_call.1} parent=1 // pred_fallthru
      _
    // Predicated region
    $region18: #{tpu_custom_call.1} parent=1 // pred_check
      _
    $region19: #{tpu_custom_call.1} parent=1 // pred_check_branch
      %51 = sbr.rel (0) target = $region21
    $region20: #{tpu_custom_call.1} parent=1 // pred_region
      _
    $region21: #{tpu_custom_call.1} parent=1 // pred_fallthru
      _
    %52 = vsyncpa [#allocation3], 1

</llo_original>
